<compile_context>
chip_gen: v5e
topology: v5e:2x2
jax: 0.10.0
libtpu: 0.0.40
codegen_flags: <defaults>
</compile_context>

<pallas_src>
import jax
import jax.numpy as jnp
from jax.experimental import pallas as pl
from jax.experimental.pallas import tpu as pltpu


def _round_up(x, m):
    return (x + m - 1) // m * m


def _silu(h):
    # SiLU with the divide routed to the EUP approx-reciprocal slot.
    return h * pl.reciprocal(1.0 + jnp.exp(-h), approx=True)


# ---------------------------------------------------------------------------
# Kernels
# ---------------------------------------------------------------------------

def _ffn_kernel_single(x_ref, wu_ref, wd_ref, o_ref):
    # Single H tile: both weight operands resident for the whole kernel
    # (constant block indices -> DMA'd once), no accumulator needed.
    x = x_ref[...].astype(wu_ref.dtype)                       # per-tile cast
    h = jnp.dot(x, wu_ref[...], preferred_element_type=jnp.float32)
    h = _silu(h)
    o_ref[...] = jnp.dot(h.astype(wd_ref.dtype), wd_ref[...],
                         preferred_element_type=jnp.float32).astype(o_ref.dtype)


def _ffn_kernel_acc(x_ref, wu_ref, wd_ref, o_ref, acc_ref):
    # H is a grid reduction axis; acc_ref is the resident (tm, dim) f32 acc.
    j = pl.program_id(1)

    @pl.when(j == 0)
    def _init():
        acc_ref[...] = jnp.zeros_like(acc_ref)

    x = x_ref[...].astype(wu_ref.dtype)                       # per-tile cast
    h = jnp.dot(x, wu_ref[...], preferred_element_type=jnp.float32)
    h = _silu(h)
    acc_ref[...] += jnp.dot(h.astype(wd_ref.dtype), wd_ref[...],
                            preferred_element_type=jnp.float32)

    @pl.when(j == pl.num_programs(1) - 1)
    def _store():
        o_ref[...] = acc_ref[...].astype(o_ref.dtype)


# ---------------------------------------------------------------------------
# Weight prep (outside the hot path)
# ---------------------------------------------------------------------------

def prepare_ffn_weights(w1, w2, wd, *, compute_dtype=jnp.bfloat16):
    """One-time weight prep.

    Algebraic fold: for bias-free linears,
        proj_up_1(x) + proj_up_2(x) == x @ (W1 + W2)^T,
    so the two up-projections are summed in f32 and cast once.

    w1, w2: (H, dim) PyTorch Linear layouts.  wd: (dim, H).
    Returns (w_up, wdt): w_up (dim, H) = (W1+W2)^T, wdt (H, dim) = W_down^T.
    """
    H, dim = w1.shape
    assert w2.shape == (H, dim) and wd.shape == (dim, H)
    w_up = (w1.astype(jnp.float32) + w2.astype(jnp.float32)).T.astype(compute_dtype)
    wdt = wd.T.astype(compute_dtype)
    return w_up, wdt


# ---------------------------------------------------------------------------
# Tiling / VMEM budgeting
# ---------------------------------------------------------------------------

def _vmem_capacity_bytes():
    try:
        return int(pltpu.get_tpu_info().vmem_capacity_bytes)
    except Exception:
        return 64 << 20    # conservative per-TC floor (v7x)


def _footprint_bytes(tm, tH, dim, x_bytes, cd_bytes, out_bytes, tiled_h):
    per_step = (tm * dim * x_bytes          # x row tile (original dtype)
                + dim * tH * cd_bytes       # folded up-projection weights
                + tH * dim * cd_bytes       # W_down^T rows
                + tm * dim * out_bytes)     # output tile
    total = 2 * per_step                    # double buffering
    if tiled_h:
        total += tm * dim * 4               # f32 accumulator scratch
    return total


def _choose_tiles(M, H, dim, x_bytes, cd_bytes, out_bytes, budget, tm, tH, sub):
    if tm is None:
        tm = 512
    tm = max(sub, min(_round_up(tm, sub), _round_up(M, sub)))

    if tH is None:
        # Single H tile (weights DMA'd once for the whole kernel) whenever the
        # full footprint stays within ~half of the VMEM budget.
        if _footprint_bytes(tm, H, dim, x_bytes, cd_bytes, out_bytes, False) <= budget // 2:
            return tm, H
        tH = 512
    tH = min(tH, H)
    if tH < H:
        tH = max(128, (tH // 128) * 128)

    # Shrink tiles until the double-buffered footprint fits the budget
    # (H tile first, then rows) — keeps v7x's 64 MiB VMEM happy at large dim.
    while _footprint_bytes(tm, tH, dim, x_bytes, cd_bytes, out_bytes, tH < H) > budget:
        if tH > 128:
            tH = max(128, tH // 2)
        elif tm > sub:
            tm = max(sub, _round_up(tm // 2, sub))
        else:
            break
    return tm, tH


# ---------------------------------------------------------------------------
# Pallas call wrappers
# ---------------------------------------------------------------------------

def ffn_pallas_prepared(x, w_up, wdt, *, tm=None, tH=None):
    """x: (batch, seq, dim); w_up (dim, H), wdt (H, dim) from prepare_ffn_weights."""
    batch, seq, dim = x.shape
    dim_w, H = w_up.shape
    assert dim_w == dim and wdt.shape == (H, dim)
    cd = w_up.dtype
    out_dtype = x.dtype

    x_bytes = jnp.dtype(x.dtype).itemsize
    cd_bytes = jnp.dtype(cd).itemsize
    out_bytes = jnp.dtype(out_dtype).itemsize
    sub = 16 if cd_bytes <= 2 else 8         # bf16 packs 16 rows per vreg group

    cap = _vmem_capacity_bytes()
    budget = cap - (16 << 20) if cap > (48 << 20) else cap // 2

    M = batch * seq
    tm_eff, tH_eff = _choose_tiles(M, H, dim, x_bytes, cd_bytes, out_bytes,
                                   budget, tm, tH, sub)
    nH = pl.cdiv(H, tH_eff)
    H_pad = nH * tH_eff
    M_pad = _round_up(M, tm_eff)

    x2d = x.reshape(M, dim)                  # no wrapper-side cast; kernel casts
    if M_pad != M:
        x2d = jnp.pad(x2d, ((0, M_pad - M), (0, 0)))
    if H_pad != H:
        # Zero padding is exact: silu(0) = 0, so padded hidden columns add 0.
        w_up = jnp.pad(w_up, ((0, 0), (0, H_pad - H)))
        wdt = jnp.pad(wdt, ((0, H_pad - H), (0, 0)))

    need = _footprint_bytes(tm_eff, tH_eff, dim, x_bytes, cd_bytes, out_bytes, nH > 1)
    vmem_limit = int(max(min(need + (4 << 20), cap - (8 << 20)), 32 << 20))

    # TODO(synk): on v7x (2 TensorCores/chip) use pltpu.CORE_PARALLEL on the row
    # axis to shard across both cores; plain "parallel" kept for portability.

    if nH == 1:
        grid_spec = pltpu.PrefetchScalarGridSpec(
            num_scalar_prefetch=0,
            grid=(M_pad // tm_eff,),
            in_specs=[
                pl.BlockSpec((tm_eff, dim), lambda i: (i, 0)),   # x rows
                pl.BlockSpec((dim, H_pad), lambda i: (0, 0)),    # folded up weights
                pl.BlockSpec((H_pad, dim), lambda i: (0, 0)),    # W_down^T
            ],
            out_specs=pl.BlockSpec((tm_eff, dim), lambda i: (i, 0)),
        )
        kernel = _ffn_kernel_single
        dims = ("parallel",)
    else:
        grid_spec = pltpu.PrefetchScalarGridSpec(
            num_scalar_prefetch=0,
            grid=(M_pad // tm_eff, nH),       # (rows "parallel", H "arbitrary")
            in_specs=[
                pl.BlockSpec((tm_eff, dim), lambda i, j: (i, 0)),   # x rows
                pl.BlockSpec((dim, tH_eff), lambda i, j: (0, j)),   # up weights tile
                pl.BlockSpec((tH_eff, dim), lambda i, j: (j, 0)),   # W_down^T rows
            ],
            out_specs=pl.BlockSpec((tm_eff, dim), lambda i, j: (i, 0)),
            scratch_shapes=[pltpu.VMEM((tm_eff, dim), jnp.float32)],
        )
        kernel = _ffn_kernel_acc
        dims = ("parallel", "arbitrary")

    out = pl.pallas_call(
        kernel,
        out_shape=jax.ShapeDtypeStruct((M_pad, dim), out_dtype),
        grid_spec=grid_spec,
        compiler_params=pltpu.CompilerParams(
            dimension_semantics=dims,
            vmem_limit_bytes=vmem_limit,
        ),
    )(x2d, w_up, wdt)

    if M_pad != M:
        out = out[:M]
    return out.reshape(batch, seq, dim)


def ffn_pallas(x, w1, w2, wd, *, tm=None, tH=None, compute_dtype=jnp.bfloat16):
    """Convenience wrapper.  In production, call prepare_ffn_weights() once and
    reuse (w_up, wdt) across steps so the fold/transpose is not in the hot path."""
    w_up, wdt = prepare_ffn_weights(w1, w2, wd, compute_dtype=compute_dtype)
    return ffn_pallas_prepared(x, w_up, wdt, tm=tm, tH=tH)


def ffn_reference(x, w1, w2, wd):
    """Pure-JAX reference matching the PyTorch forward exactly."""
    h = x @ w1.T + x @ w2.T
    h = h * jax.nn.sigmoid(h)
    return h @ wd.T


if __name__ == "__main__":
    key = jax.random.PRNGKey(0)
    batch, seq, dim, hidden = 2, 8, 128, 256

    k_x, k_w1, k_w2, k_wd, k_x2 = jax.random.split(key, 5)
    x = jax.random.normal(k_x, (batch, seq, dim), dtype=jnp.float32)
    w1 = jax.random.normal(k_w1, (hidden, dim), dtype=jnp.float32) / jnp.sqrt(dim)
    w2 = jax.random.normal(k_w2, (hidden, dim), dtype=jnp.float32) / jnp.sqrt(dim)
    wd = jax.random.normal(k_wd, (dim, hidden), dtype=jnp.float32) / jnp.sqrt(hidden)

    y_ref = ffn_reference(x, w1, w2, wd)

    # 1) f32 compute path, single resident H tile (no accumulator scratch).
    y_f32 = jax.block_until_ready(
        ffn_pallas(x, w1, w2, wd, compute_dtype=jnp.float32))
    assert y_f32.shape == (batch, seq, dim)
    assert jnp.allclose(y_f32, y_ref, atol=3e-2, rtol=3e-2), "f32 mismatch"

    # 2) default bf16 compute path with the H reduction tiled (tH=128 -> 2
    #    tiles) to exercise the pl.when init / accumulate / writeback path.
    y_bf16 = jax.block_until_ready(ffn_pallas(x, w1, w2, wd, tH=128))
    assert jnp.allclose(y_bf16.astype(jnp.float32), y_ref,
                        atol=1e-1, rtol=1e-1), "bf16 mismatch"

    # 3) ragged row count (batch*seq not a multiple of the sublane pack).
    x_odd = x[:, : seq - 1]
    y_odd = jax.block_until_ready(ffn_pallas(x_odd, w1, w2, wd, tH=128))
    assert jnp.allclose(y_odd.astype(jnp.float32),
                        ffn_reference(x_odd, w1, w2, wd),
                        atol=1e-1, rtol=1e-1), "padded-M mismatch"

    # 4) multi row-tile x multi H-tile grid (forced small tiles).
    x_big = jax.random.normal(k_x2, (batch, 40, dim), dtype=jnp.float32)
    y_big = jax.block_until_ready(ffn_pallas(x_big, w1, w2, wd, tm=16, tH=128))
    assert jnp.allclose(y_big.astype(jnp.float32),
                        ffn_reference(x_big, w1, w2, wd),
                        atol=1e-1, rtol=1e-1), "grid mismatch"

    print("KERNEL_OK")
</pallas_src>

<mosaic_0001>
module attributes {stable_mosaic.version = 11 : i64} {
  func.func @_ffn_kernel_single(%arg0: i32, %arg1: memref<16x128xf32, #tpu.memory_space<vmem>>, %arg2: memref<128x256xf32, #tpu.memory_space<vmem>>, %arg3: memref<256x128xf32, #tpu.memory_space<vmem>>, %arg4: memref<16x128xf32, #tpu.memory_space<vmem>>) attributes {dimension_semantics = [#tpu.dimension_semantics<parallel>], iteration_bounds = array<i64: 1>, scalar_prefetch = 0 : i64, scratch_operands = 0 : i64, tpu.core_type = #tpu.core_type<tc>, window_params = [{transform_indices = @transform_0, window_bounds = array<i64: 16, 128>}, {pipeline_mode = #tpu.pipeline_mode<synchronous>, transform_indices = @transform_1, window_bounds = array<i64: 128, 256>}, {pipeline_mode = #tpu.pipeline_mode<synchronous>, transform_indices = @transform_2, window_bounds = array<i64: 256, 128>}, {transform_indices = @transform_3, window_bounds = array<i64: 16, 128>}]} {
    %c0 = arith.constant 0 : index
    %c0_0 = arith.constant 0 : index
    %0 = vector.load %arg1[%c0, %c0_0] : memref<16x128xf32, #tpu.memory_space<vmem>>, vector<16x128xf32>
    %c0_1 = arith.constant 0 : index
    %c0_2 = arith.constant 0 : index
    %1 = vector.load %arg2[%c0_1, %c0_2] : memref<128x256xf32, #tpu.memory_space<vmem>>, vector<128x256xf32>
    %cst = arith.constant dense<0.000000e+00> : vector<16x256xf32>
    %2 = tpu.matmul %0, %1, %cst {dimension_numbers = #tpu.dot_dimension_numbers<[1], [0], [0], [1], [0, 0, 1, 1], [], []>} : vector<16x128xf32>, vector<128x256xf32>, vector<16x256xf32> -> vector<16x256xf32>
    %cst_3 = arith.constant 0.000000e+00 : f32
    %3 = vector.broadcast %cst_3 : f32 to vector<16x256xf32>
    %4 = arith.subf %3, %2 : vector<16x256xf32>
    %5 = math.exp %4 : vector<16x256xf32>
    %cst_4 = arith.constant 1.000000e+00 : f32
    %6 = vector.broadcast %cst_4 : f32 to vector<16x256xf32>
    %7 = arith.addf %6, %5 : vector<16x256xf32>
    %8 = tpu.reciprocal %7 {approx = true} : vector<16x256xf32> -> vector<16x256xf32>
    %9 = arith.mulf %2, %8 : vector<16x256xf32>
    %c0_5 = arith.constant 0 : index
    %c0_6 = arith.constant 0 : index
    %10 = vector.load %arg3[%c0_5, %c0_6] : memref<256x128xf32, #tpu.memory_space<vmem>>, vector<256x128xf32>
    %cst_7 = arith.constant dense<0.000000e+00> : vector<16x128xf32>
    %11 = tpu.matmul %9, %10, %cst_7 {dimension_numbers = #tpu.dot_dimension_numbers<[1], [0], [0], [1], [0, 0, 1, 1], [], []>} : vector<16x256xf32>, vector<256x128xf32>, vector<16x128xf32> -> vector<16x128xf32>
    %c0_8 = arith.constant 0 : index
    %c0_9 = arith.constant 0 : index
    %12 = vector.load %arg4[%c0_8, %c0_9] : memref<16x128xf32, #tpu.memory_space<vmem>>, vector<16x128xf32>
    tpu.vector_store %arg4[%c0_8, %c0_9], %11 {strides = array<i32>} : memref<16x128xf32, #tpu.memory_space<vmem>>, vector<16x128xf32>,
    return
  }
  func.func @transform_0(%arg0: i32) -> (i32, i32) {
    %c0_i32 = arith.constant 0 : i32
    %c0_i32_0 = arith.constant 0 : i32
    return %arg0, %c0_i32 : i32, i32
  }
  func.func @transform_1(%arg0: i32) -> (i32, i32) {
    %c0_i32 = arith.constant 0 : i32
    %c0_i32_0 = arith.constant 0 : i32
    %c0_i32_1 = arith.constant 0 : i32
    return %c0_i32, %c0_i32_0 : i32, i32
  }
  func.func @transform_2(%arg0: i32) -> (i32, i32) {
    %c0_i32 = arith.constant 0 : i32
    %c0_i32_0 = arith.constant 0 : i32
    %c0_i32_1 = arith.constant 0 : i32
    return %c0_i32, %c0_i32_0 : i32, i32
  }
  func.func @transform_3(%arg0: i32) -> (i32, i32) {
    %c0_i32 = arith.constant 0 : i32
    %c0_i32_0 = arith.constant 0 : i32
    return %arg0, %c0_i32 : i32, i32
  }
}

</mosaic_0001>

<llo_original>
// kernel: tpu_custom_call.1
$region0: #{tpu_custom_call.1}
  #allocation0 [shape = 'u32[]', space=smem, size = 0x4, offset = 0x4, fixed_abs, tag = 'smem constant byte address 0x4 - core index']
  #allocation1 [shape = 'u32[72,128]{1,0:T(1,128)}', space=vmem, size = 0x9000, scoped, tag = 'internal scratch']
  %s0 = inlined_call_operand.hbm [shape: f32[16,128], index: 0, kind: input, shape index: {}]
  %s1 = inlined_call_operand.hbm [shape: f32[128,256], index: 1, kind: input, shape index: {}]
  %s2 = inlined_call_operand.hbm [shape: f32[256,128], index: 2, kind: input, shape index: {}]
  %s3 = inlined_call_operand.hbm [shape: f32[16,128], index: 3, kind: output, shape index: {}]
  %s4 = sld [smem:[#allocation0]]
  $region34: #{tpu_custom_call.1} parent=0
    _
  %s6 = ssub.s32 1, %s4
  %s7 = scalar_select 0, %s6, %s4
  $region1: #{tpu_custom_call.1} parent=0
    #allocation2 [shape = 'u8[8192]{0}', space=vmem, size = 0x2000, scoped, tag = 'input window, operand 0, single buffered']
    #allocation3 [shape = 's32[1]{0}', space=sflag, size = 0x4, scoped, tag = 'scoped memory for tpu_custom_call.1']
    #allocation4 [shape = 's32[1]{0}', space=sflag, size = 0x4, scoped, tag = 'scoped memory for tpu_custom_call.1']
    #allocation5 [shape = 'u8[131072]{0}', space=vmem, size = 0x20000, scoped, tag = 'input window, operand 1, single buffered']
    #allocation6 [shape = 's32[1]{0}', space=sflag, size = 0x4, scoped, tag = 'scoped memory for tpu_custom_call.1']
    #allocation7 [shape = 'u8[131072]{0}', space=vmem, size = 0x20000, scoped, tag = 'input window, operand 2, single buffered']
    #allocation8 [shape = 'u8[8192]{0}', space=vmem, size = 0x2000, scoped, tag = 'output window, operand 0, single buffered']
    %8 = vsyncpa [#allocation3], 0
    %9 = vsyncpa [#allocation6], 0
    %10 = vsyncpa [#allocation4], 0
    // Predicated region
    $region2: #{tpu_custom_call.1} parent=1 // pred_check
      _
    $region3: #{tpu_custom_call.1} parent=1 // pred_check_branch
      %12 = sbr.rel (0) target = $region5
    $region4: #{tpu_custom_call.1} parent=1 // pred_region
      %14 = vsyncadd [#allocation3], 0
      %s15 = sshll.u32 %s0, 4
      %s16 = int_to_ptr.hbm [resolvable:$true] %s15
      %s17 = sshll.u32 [#allocation2], 4
      %s18 = int_to_ptr.vmem [resolvable:$true] %s17
      %23 = dma.hbm_to_vmem [thread:$0]  %s16, 256, %s18, [#allocation3], 128, 128, 8
    $region5: #{tpu_custom_call.1} parent=1 // pred_fallthru
      _
    // Predicated region
    $region6: #{tpu_custom_call.1} parent=1 // pred_check
      _
    $region7: #{tpu_custom_call.1} parent=1 // pred_check_branch
      %25 = sbr.rel (0) target = $region9
    $region8: #{tpu_custom_call.1} parent=1 // pred_region
      %27 = vsyncadd [#allocation6], 0
      %s28 = sshll.u32 %s1, 4
      %s29 = int_to_ptr.hbm [resolvable:$true] %s28
      %s30 = sshll.u32 [#allocation5], 4
      %s31 = int_to_ptr.vmem [resolvable:$true] %s30
      %36 = dma.hbm_to_vmem [thread:$0]  %s29, 4096, %s31, [#allocation6], 256, 256, 16
    $region9: #{tpu_custom_call.1} parent=1 // pred_fallthru
      _
    // Predicated region
    $region10: #{tpu_custom_call.1} parent=1 // pred_check
      _
    $region11: #{tpu_custom_call.1} parent=1 // pred_check_branch
      %38 = sbr.rel (0) target = $region13
    $region12: #{tpu_custom_call.1} parent=1 // pred_region
      %40 = vsyncadd [#allocation6], 0
      %s41 = sshll.u32 %s2, 4
      %s42 = int_to_ptr.hbm [resolvable:$true] %s41
      %s43 = sshll.u32 [#allocation7], 4
      %s44 = int_to_ptr.vmem [resolvable:$true] %s43
      %49 = dma.hbm_to_vmem [thread:$0]  %s42, 4096, %s44, [#allocation6], 128, 128, 8
    $region13: #{tpu_custom_call.1} parent=1 // pred_fallthru
      _
    // Predicated region
    $region14: #{tpu_custom_call.1} parent=1 // pred_check
      _
    $region15: #{tpu_custom_call.1} parent=1 // pred_check_branch
      %51 = sbr.rel (0) target = $region17
    $region16: #{tpu_custom_call.1} parent=1 // pred_region
      %53 = dma.done [#allocation3], 256
    $region17: #{tpu_custom_call.1} parent=1 // pred_fallthru
      _
    // Predicated region
    $region18: #{tpu_custom_call.1} parent=1 // pred_check
      _
    $region19: #{tpu_custom_call.1} parent=1 // pred_check_branch
      %55 = sbr.rel (0) target = $region21
    $region20: #{tpu_custom_call.1} parent=1 // pred_region
      %57 = dma.done [#allocation6], 4096
    $region21: #{tpu_custom_call.1} parent=1 // pred_fallthru
      _
    // Predicated region
    $region22: #{tpu_custom_call.1} parent=1 // pred_check
      _
    $region23: #{tpu_custom_call.1} parent=1 // pred_check_branch
      %59 = sbr.rel (0) target = $region25
    $region24: #{tpu_custom_call.1} parent=1 // pred_region
      %61 = dma.done [#allocation6], 4096
    $region25: #{tpu_custom_call.1} parent=1 // pred_fallthru
      _
    %v62 = vld [vmem:[#allocation2] sm:$0xff]
    %v63 = vld [vmem:[#allocation2 + $0x8] sm:$0xff]
    %v64 = vld [vmem:[#allocation5] sm:$0xff]
    %v65 = vld [vmem:[#allocation5 + $0x8] sm:$0xff]
    %v66 = vld [vmem:[#allocation5 + $0x10] sm:$0xff]
    %v67 = vld [vmem:[#allocation5 + $0x18] sm:$0xff]
    %v68 = vld [vmem:[#allocation5 + $0x20] sm:$0xff]
    %v69 = vld [vmem:[#allocation5 + $0x28] sm:$0xff]
    %v70 = vld [vmem:[#allocation5 + $0x30] sm:$0xff]
    %v71 = vld [vmem:[#allocation5 + $0x38] sm:$0xff]
    %v72 = vld [vmem:[#allocation5 + $0x40] sm:$0xff]
    %v73 = vld [vmem:[#allocation5 + $0x48] sm:$0xff]
    %v74 = vld [vmem:[#allocation5 + $0x50] sm:$0xff]
    %v75 = vld [vmem:[#allocation5 + $0x58] sm:$0xff]
    %v76 = vld [vmem:[#allocation5 + $0x60] sm:$0xff]
    %v77 = vld [vmem:[#allocation5 + $0x68] sm:$0xff]
    %v78 = vld [vmem:[#allocation5 + $0x70] sm:$0xff]
    %v79 = vld [vmem:[#allocation5 + $0x78] sm:$0xff]
    %v80 = vld [vmem:[#allocation5 + $0x80] sm:$0xff]
    %v81 = vld [vmem:[#allocation5 + $0x88] sm:$0xff]
    %v82 = vld [vmem:[#allocation5 + $0x90] sm:$0xff]
    %v83 = vld [vmem:[#allocation5 + $0x98] sm:$0xff]
    %v84 = vld [vmem:[#allocation5 + $0xa0] sm:$0xff]
    %v85 = vld [vmem:[#allocation5 + $0xa8] sm:$0xff]
    %v86 = vld [vmem:[#allocation5 + $0xb0] sm:$0xff]
    %v87 = vld [vmem:[#allocation5 + $0xb8] sm:$0xff]
    %v88 = vld [vmem:[#allocation5 + $0xc0] sm:$0xff]
    %v89 = vld [vmem:[#allocation5 + $0xc8] sm:$0xff]
    %v90 = vld [vmem:[#allocation5 + $0xd0] sm:$0xff]
    %v91 = vld [vmem:[#allocation5 + $0xd8] sm:$0xff]
    %v92 = vld [vmem:[#allocation5 + $0xe0] sm:$0xff]
    %v93 = vld [vmem:[#allocation5 + $0xe8] sm:$0xff]
    %v94 = vld [vmem:[#allocation5 + $0xf0] sm:$0xff]
    %v95 = vld [vmem:[#allocation5 + $0xf8] sm:$0xff]
    %96 = vmatpush.msra.mxu0 %v94
    %97 = vmatpush.msra.mxu0 %v92
    %98 = vmatpush.msra.mxu0 %v90
    %99 = vmatpush.msra.mxu0 %v88
    %100 = vmatpush.msra.mxu0 %v86
    %101 = vmatpush.msra.mxu0 %v84
    %102 = vmatpush.msra.mxu0 %v82
    %103 = vmatpush.msra.mxu0 %v80
    %104 = vmatpush.msra.mxu0 %v78
    %105 = vmatpush.msra.mxu0 %v76
    %106 = vmatpush.msra.mxu0 %v74
    %107 = vmatpush.msra.mxu0 %v72
    %108 = vmatpush.msra.mxu0 %v70
    %109 = vmatpush.msra.mxu0 %v68
    %110 = vmatpush.msra.mxu0 %v66
    %111 = vmatpush.msra.mxu0 %v64
    %112 = vmatmul.f32.gmra.mxu0 %v62
    %v113 = vpop.f32.mrf.mxu0
    %v114 = vadd.f32 0.0, %v113
    %115 = vmatmul.f32.gmra.mxu0 %v63
    %v116 = vpop.f32.mrf.mxu0
    %v117 = vadd.f32 0.0, %v116
    %118 = vdwg.mxu0
    %119 = vmatpush.msra.mxu0 %v95
    %120 = vmatpush.msra.mxu0 %v93
    %121 = vmatpush.msra.mxu0 %v91
    %122 = vmatpush.msra.mxu0 %v89
    %123 = vmatpush.msra.mxu0 %v87
    %124 = vmatpush.msra.mxu0 %v85
    %125 = vmatpush.msra.mxu0 %v83
    %126 = vmatpush.msra.mxu0 %v81
    %127 = vmatpush.msra.mxu0 %v79
    %128 = vmatpush.msra.mxu0 %v77
    %129 = vmatpush.msra.mxu0 %v75
    %130 = vmatpush.msra.mxu0 %v73
    %131 = vmatpush.msra.mxu0 %v71
    %132 = vmatpush.msra.mxu0 %v69
    %133 = vmatpush.msra.mxu0 %v67
    %134 = vmatpush.msra.mxu0 %v65
    %135 = vmatmul.f32.gmra.mxu0 %v62
    %v136 = vpop.f32.mrf.mxu0
    %v137 = vadd.f32 0.0, %v136
    %138 = vmatmul.f32.gmra.mxu0 %v63
    %v139 = vpop.f32.mrf.mxu0
    %v140 = vadd.f32 0.0, %v139
    %141 = vdwg.mxu0
    %v142 = vsub.f32 0.0, %v114
    %v143 = vsub.f32 0.0, %v137
    %v144 = vsub.f32 0.0, %v117
    %v145 = vsub.f32 0.0, %v140
    %v146 = vmul.f32 %v142, 1.442695
    %v147 = vpow.pop %v146
    %v148 = vmul.f32 %v143, 1.442695
    %v149 = vpow.pop %v148
    %v150 = vmul.f32 %v144, 1.442695
    %v151 = vpow.pop %v150
    %v152 = vmul.f32 %v145, 1.442695
    %v153 = vpow.pop %v152
    %v154 = vadd.f32 %v147, 1.0
    %v155 = vadd.f32 %v149, 1.0
    %v156 = vadd.f32 %v151, 1.0
    %v157 = vadd.f32 %v153, 1.0
    %v158 = vrcp.pop %v154
    %v159 = vrcp.pop %v155
    %v160 = vrcp.pop %v156
    %v161 = vrcp.pop %v157
    %v162 = vmul.f32 %v114, %v158
    %v163 = vmul.f32 %v137, %v159
    %v164 = vmul.f32 %v117, %v160
    %v165 = vmul.f32 %v140, %v161
    %v166 = vld [vmem:[#allocation7] sm:$0xff]
    %v167 = vld [vmem:[#allocation7 + $0x8] sm:$0xff]
    %v168 = vld [vmem:[#allocation7 + $0x10] sm:$0xff]
    %v169 = vld [vmem:[#allocation7 + $0x18] sm:$0xff]
    %v170 = vld [vmem:[#allocation7 + $0x20] sm:$0xff]
    %v171 = vld [vmem:[#allocation7 + $0x28] sm:$0xff]
    %v172 = vld [vmem:[#allocation7 + $0x30] sm:$0xff]
    %v173 = vld [vmem:[#allocation7 + $0x38] sm:$0xff]
    %v174 = vld [vmem:[#allocation7 + $0x40] sm:$0xff]
    %v175 = vld [vmem:[#allocation7 + $0x48] sm:$0xff]
    %v176 = vld [vmem:[#allocation7 + $0x50] sm:$0xff]
    %v177 = vld [vmem:[#allocation7 + $0x58] sm:$0xff]
    %v178 = vld [vmem:[#allocation7 + $0x60] sm:$0xff]
    %v179 = vld [vmem:[#allocation7 + $0x68] sm:$0xff]
    %v180 = vld [vmem:[#allocation7 + $0x70] sm:$0xff]
    %v181 = vld [vmem:[#allocation7 + $0x78] sm:$0xff]
    %v182 = vld [vmem:[#allocation7 + $0x80] sm:$0xff]
    %v183 = vld [vmem:[#allocation7 + $0x88] sm:$0xff]
    %v184 = vld [vmem:[#allocation7 + $0x90] sm:$0xff]
    %v185 = vld [vmem:[#allocation7 + $0x98] sm:$0xff]
    %v186 = vld [vmem:[#allocation7 + $0xa0] sm:$0xff]
    %v187 = vld [vmem:[#allocation7 + $0xa8] sm:$0xff]
    %v188 = vld [vmem:[#allocation7 + $0xb0] sm:$0xff]
    %v189 = vld [vmem:[#allocation7 + $0xb8] sm:$0xff]
    %v190 = vld [vmem:[#allocation7 + $0xc0] sm:$0xff]
    %v191 = vld [vmem:[#allocation7 + $0xc8] sm:$0xff]
    %v192 = vld [vmem:[#allocation7 + $0xd0] sm:$0xff]
    %v193 = vld [vmem:[#allocation7 + $0xd8] sm:$0xff]
    %v194 = vld [vmem:[#allocation7 + $0xe0] sm:$0xff]
    %v195 = vld [vmem:[#allocation7 + $0xe8] sm:$0xff]
    %v196 = vld [vmem:[#allocation7 + $0xf0] sm:$0xff]
    %v197 = vld [vmem:[#allocation7 + $0xf8] sm:$0xff]
    %198 = vmatpush.msra.mxu0 %v181
    %199 = vmatpush.msra.mxu0 %v180
    %200 = vmatpush.msra.mxu0 %v179
    %201 = vmatpush.msra.mxu0 %v178
    %202 = vmatpush.msra.mxu0 %v177
    %203 = vmatpush.msra.mxu0 %v176
    %204 = vmatpush.msra.mxu0 %v175
    %205 = vmatpush.msra.mxu0 %v174
    %206 = vmatpush.msra.mxu0 %v173
    %207 = vmatpush.msra.mxu0 %v172
    %208 = vmatpush.msra.mxu0 %v171
    %209 = vmatpush.msra.mxu0 %v170
    %210 = vmatpush.msra.mxu0 %v169
    %211 = vmatpush.msra.mxu0 %v168
    %212 = vmatpush.msra.mxu0 %v167
    %213 = vmatpush.msra.mxu0 %v166
    %214 = vmatmul.f32.gmra.mxu0 %v162
    %v215 = vpop.f32.mrf.mxu0
    %v216 = vadd.f32 0.0, %v215
    %217 = vmatmul.f32.gmra.mxu0 %v164
    %v218 = vpop.f32.mrf.mxu0
    %v219 = vadd.f32 0.0, %v218
    %220 = vdwg.mxu0
    %221 = vmatpush.msra.mxu0 %v197
    %222 = vmatpush.msra.mxu0 %v196
    %223 = vmatpush.msra.mxu0 %v195
    %224 = vmatpush.msra.mxu0 %v194
    %225 = vmatpush.msra.mxu0 %v193
    %226 = vmatpush.msra.mxu0 %v192
    %227 = vmatpush.msra.mxu0 %v191
    %228 = vmatpush.msra.mxu0 %v190
    %229 = vmatpush.msra.mxu0 %v189
    %230 = vmatpush.msra.mxu0 %v188
    %231 = vmatpush.msra.mxu0 %v187
    %232 = vmatpush.msra.mxu0 %v186
    %233 = vmatpush.msra.mxu0 %v185
    %234 = vmatpush.msra.mxu0 %v184
    %235 = vmatpush.msra.mxu0 %v183
    %236 = vmatpush.msra.mxu0 %v182
    %237 = vmatmul.f32.gmra.mxu0 %v163
    %v238 = vpop.f32.mrf.mxu0
    %v239 = vadd.f32 %v216, %v238
    %240 = vmatmul.f32.gmra.mxu0 %v165
    %v241 = vpop.f32.mrf.mxu0
    %v242 = vadd.f32 %v219, %v241
    %243 = vdwg.mxu0
    %244 = vst [vmem:[#allocation8] sm:$0xff] %v239
    %245 = vst [vmem:[#allocation8 + $0x8] sm:$0xff] %v242
    // Predicated region
    $region26: #{tpu_custom_call.1} parent=1 // pred_check
      _
    $region27: #{tpu_custom_call.1} parent=1 // pred_check_branch
      %247 = sbr.rel (0) target = $region29
    $region28: #{tpu_custom_call.1} parent=1 // pred_region
      %249 = vsyncadd [#allocation4], 0
      %s250 = sshll.u32 [#allocation8], 4
      %s251 = int_to_ptr.vmem [resolvable:$true] %s250
      %s252 = sshll.u32 %s3, 4
      %s253 = int_to_ptr.hbm [resolvable:$true] %s252
      %258 = dma.vmem_to_hbm [thread:$0]  %s251, 256, %s253, [#allocation4], 128, 128, 8
    $region29: #{tpu_custom_call.1} parent=1 // pred_fallthru
      _
    // Predicated region
    $region30: #{tpu_custom_call.1} parent=1 // pred_check
      _
    $region31: #{tpu_custom_call.1} parent=1 // pred_check_branch
      %260 = sbr.rel (0) target = $region33
    $region32: #{tpu_custom_call.1} parent=1 // pred_region
      %262 = dma.done [#allocation4], 256
    $region33: #{tpu_custom_call.1} parent=1 // pred_fallthru
      _
    %263 = vsyncpa [#allocation3], 1
    %264 = vsyncpa [#allocation6], 1
    %265 = vsyncpa [#allocation4], 1

</llo_original>
